<compile_context>
chip_gen: v7x
topology: tpu7x:2x2x1
jax: 0.10.0
libtpu: 0.0.40
codegen_flags: <defaults>
</compile_context>

<pallas_src>
import math
import jax
import jax.numpy as jnp
from jax.experimental import pallas as pl
from jax.experimental.pallas import tpu as pltpu

IN_FEATURES = 9
HIDDEN = 50
LANE = 128             # pad hidden dim to the 128-lane vreg width (perfect MXU K/N fit)
MAX_BATCH_TILE = 1024  # multiple of 256 (v6e/v7x MXU) and 128 (v5e MXU); ~few MiB/step
                       # NOTE: on v5e consider batch_tile=256 to keep f32 intermediates
                       # out of the spill path (only 1 vst slot there).


def _mlp_kernel(x_ref, w1_ref, w2_ref, w3_ref, o_ref):
    # Fused 3-layer bias-free MLP: f32 input cast to bf16 in-kernel, bf16 MXU
    # operands, f32 accumulation, ReLU in f32.
    x = x_ref[...].astype(jnp.bfloat16)                              # (bt, 9)
    # TODO(synk): optional experiment (v6e/v7x): compute this K=9 layer as 9
    # broadcast multiply-adds on the VPU to free ~1/3 of MXU pushes.
    h1 = jnp.dot(x, w1_ref[...], preferred_element_type=jnp.float32)
    h1 = jnp.maximum(h1, 0.0).astype(jnp.bfloat16)                   # (bt, Hp)
    h2 = jnp.dot(h1, w2_ref[...], preferred_element_type=jnp.float32)
    h2 = jnp.maximum(h2, 0.0).astype(jnp.bfloat16)                   # (bt, Hp)
    out = jnp.dot(h2, w3_ref[...], preferred_element_type=jnp.float32)
    o_ref[...] = out.astype(o_ref.dtype)                             # (bt, 9)


def prepare_weights(w1, w2, w3):
    """Zero-pad the hidden dim to a multiple of 128 and cast to bf16.

    Call ONCE (weights are static across forward calls). Zero rows/columns are
    mathematically inert through a bias-free Linear+ReLU stack; this would NOT
    hold if biases were added."""
    h = w1.shape[1]
    h_pad = pl.cdiv(h, LANE) * LANE
    w1p = jnp.pad(w1, ((0, 0), (0, h_pad - h))).astype(jnp.bfloat16)
    w2p = jnp.pad(w2, ((0, h_pad - h), (0, h_pad - h))).astype(jnp.bfloat16)
    w3p = jnp.pad(w3, ((0, h_pad - h), (0, 0))).astype(jnp.bfloat16)
    return w1p, w2p, w3p


def _choose_batch_tile(n):
    # Small / moderate batches: one grid step covering the whole batch (block
    # dim == full array dim, so no sublane-divisibility constraint applies).
    # Only split when there is real work per step; each grid step costs
    # ~0.35 us of fixed overhead.
    if n <= MAX_BATCH_TILE:
        return n
    return MAX_BATCH_TILE  # divisible by 8/128/256; partial last block is masked


def naive_collision_forward(x, w1p, w2p, w3p, *, batch_tile=None):
    """x: (N, 9) f32; w1p: (9, Hp) bf16; w2p: (Hp, Hp) bf16; w3p: (Hp, 9) bf16.

    Weights must already be padded/cast via prepare_weights(). Returns (N, 9) f32."""
    n, f = x.shape
    assert f == IN_FEATURES
    h_pad = w1p.shape[1]
    assert h_pad % LANE == 0 and w2p.shape == (h_pad, h_pad) and w3p.shape == (h_pad, IN_FEATURES)

    if batch_tile is None:
        batch_tile = _choose_batch_tile(n)

    grid = (pl.cdiv(n, batch_tile),)
    # No wrapper-side pad/slice: Pallas masks the writeback of the partial last
    # block; garbage rows in its input only feed output rows that are dropped.
    # VMEM/step at bt=1024, Hp=128: x/out tiles (~72 KiB x2) + weights (~37 KiB)
    # + f32 intermediates (~1 MiB) << 32 MiB scoped default on all generations.
    out = pl.pallas_call(
        _mlp_kernel,
        out_shape=jax.ShapeDtypeStruct((n, IN_FEATURES), jnp.float32),
        grid_spec=pltpu.PrefetchScalarGridSpec(
            num_scalar_prefetch=0,
            grid=grid,
            in_specs=[
                pl.BlockSpec((batch_tile, IN_FEATURES), lambda i: (i, 0)),
                # Grid-invariant weight blocks (index_map always (0, 0)): Pallas
                # does not re-fetch them between consecutive steps.
                pl.BlockSpec((IN_FEATURES, h_pad), lambda i: (0, 0)),
                pl.BlockSpec((h_pad, h_pad), lambda i: (0, 0)),
                pl.BlockSpec((h_pad, IN_FEATURES), lambda i: (0, 0)),
            ],
            out_specs=pl.BlockSpec((batch_tile, IN_FEATURES), lambda i: (i, 0)),
        ),
        compiler_params=pltpu.CompilerParams(
            dimension_semantics=("parallel",),  # megacore split on v7x when grid > 1
        ),
    )(x, w1p, w2p, w3p)
    return out


def init_params(key, hidden_size=HIDDEN):
    """Deterministic init mimicking PyTorch nn.Linear (uniform(-1/sqrt(in), 1/sqrt(in))).

    Weights are returned already transposed to (in_features, out_features), f32."""
    k1, k2, k3 = jax.random.split(key, 3)

    def _w(k, in_f, out_f):
        bound = 1.0 / math.sqrt(in_f)
        return jax.random.uniform(
            k, (in_f, out_f), dtype=jnp.float32, minval=-bound, maxval=bound
        )

    w1 = _w(k1, IN_FEATURES, hidden_size)
    w2 = _w(k2, hidden_size, hidden_size)
    w3 = _w(k3, hidden_size, IN_FEATURES)
    return w1, w2, w3


def _reference(x, w1, w2, w3):
    # Plain-JAX reference mirroring the kernel's numerics (bf16 MXU operands,
    # f32 accumulation) for a tight correctness check. Note: a true f32
    # PyTorch NaiveCollision differs from this by ~1e-2 relative (bf16 rounding).
    xb = x.astype(jnp.bfloat16)
    w1b, w2b, w3b = (w.astype(jnp.bfloat16) for w in (w1, w2, w3))
    h1 = jnp.maximum(jnp.dot(xb, w1b, preferred_element_type=jnp.float32), 0.0)
    h1 = h1.astype(jnp.bfloat16)
    h2 = jnp.maximum(jnp.dot(h1, w2b, preferred_element_type=jnp.float32), 0.0)
    h2 = h2.astype(jnp.bfloat16)
    return jnp.dot(h2, w3b, preferred_element_type=jnp.float32)


if __name__ == "__main__":
    key = jax.random.PRNGKey(0)
    kx, kw = jax.random.split(key)

    batch = 64  # small example batch of 9-dim velocity populations
    x = jax.random.normal(kx, (batch, IN_FEATURES), dtype=jnp.float32)
    w1, w2, w3 = init_params(kw)

    # One-time weight preparation (pad hidden dim to 128, cast to bf16).
    w1p, w2p, w3p = prepare_weights(w1, w2, w3)

    out = naive_collision_forward(x, w1p, w2p, w3p)
    out = jax.block_until_ready(out)

    ref = _reference(x, w1, w2, w3)
    assert out.shape == (batch, IN_FEATURES)
    # bf16 operands => compare against the bf16-mirroring reference with a
    # tolerance consistent with bf16 rounding (f32 accumulation keeps it small).
    assert jnp.allclose(out, ref, atol=2e-2, rtol=2e-2), float(
        jnp.max(jnp.abs(out - ref))
    )

    print("KERNEL_OK")
</pallas_src>

<mosaic_0001>
module attributes {stable_mosaic.version = 11 : i64} {
  func.func @_mlp_kernel(%arg0: i32, %arg1: memref<64x9xf32, #tpu.memory_space<vmem>>, %arg2: memref<9x128xbf16, #tpu.memory_space<vmem>>, %arg3: memref<128x128xbf16, #tpu.memory_space<vmem>>, %arg4: memref<128x9xbf16, #tpu.memory_space<vmem>>, %arg5: memref<64x9xf32, #tpu.memory_space<vmem>>) attributes {dimension_semantics = [#tpu.dimension_semantics<parallel>], iteration_bounds = array<i64: 1>, scalar_prefetch = 0 : i64, scratch_operands = 0 : i64, tpu.core_type = #tpu.core_type<tc>, window_params = [{transform_indices = @transform_0, window_bounds = array<i64: 64, 9>}, {pipeline_mode = #tpu.pipeline_mode<synchronous>, transform_indices = @transform_1, window_bounds = array<i64: 9, 128>}, {pipeline_mode = #tpu.pipeline_mode<synchronous>, transform_indices = @transform_2, window_bounds = array<i64: 128, 128>}, {pipeline_mode = #tpu.pipeline_mode<synchronous>, transform_indices = @transform_3, window_bounds = array<i64: 128, 9>}, {transform_indices = @transform_4, window_bounds = array<i64: 64, 9>}]} {
    %c0 = arith.constant 0 : index
    %c0_0 = arith.constant 0 : index
    %0 = vector.load %arg1[%c0, %c0_0] : memref<64x9xf32, #tpu.memory_space<vmem>>, vector<64x9xf32>
    %1 = arith.truncf %0 : vector<64x9xf32> to vector<64x9xbf16>
    %c0_1 = arith.constant 0 : index
    %c0_2 = arith.constant 0 : index
    %2 = vector.load %arg2[%c0_1, %c0_2] : memref<9x128xbf16, #tpu.memory_space<vmem>>, vector<9x128xbf16>
    %cst = arith.constant dense<0.000000e+00> : vector<64x128xf32>
    %3 = tpu.matmul %1, %2, %cst {dimension_numbers = #tpu.dot_dimension_numbers<[1], [0], [0], [1], [0, 0, 1, 1], [], []>} : vector<64x9xbf16>, vector<9x128xbf16>, vector<64x128xf32> -> vector<64x128xf32>
    %cst_3 = arith.constant 0.000000e+00 : f32
    %4 = vector.broadcast %cst_3 : f32 to vector<64x128xf32>
    %5 = arith.maximumf %3, %4 : vector<64x128xf32>
    %6 = arith.truncf %5 : vector<64x128xf32> to vector<64x128xbf16>
    %c0_4 = arith.constant 0 : index
    %c0_5 = arith.constant 0 : index
    %7 = vector.load %arg3[%c0_4, %c0_5] : memref<128x128xbf16, #tpu.memory_space<vmem>>, vector<128x128xbf16>
    %cst_6 = arith.constant dense<0.000000e+00> : vector<64x128xf32>
    %8 = tpu.matmul %6, %7, %cst_6 {dimension_numbers = #tpu.dot_dimension_numbers<[1], [0], [0], [1], [0, 0, 1, 1], [], []>} : vector<64x128xbf16>, vector<128x128xbf16>, vector<64x128xf32> -> vector<64x128xf32>
    %cst_7 = arith.constant 0.000000e+00 : f32
    %9 = vector.broadcast %cst_7 : f32 to vector<64x128xf32>
    %10 = arith.maximumf %8, %9 : vector<64x128xf32>
    %11 = arith.truncf %10 : vector<64x128xf32> to vector<64x128xbf16>
    %c0_8 = arith.constant 0 : index
    %c0_9 = arith.constant 0 : index
    %12 = vector.load %arg4[%c0_8, %c0_9] : memref<128x9xbf16, #tpu.memory_space<vmem>>, vector<128x9xbf16>
    %cst_10 = arith.constant dense<0.000000e+00> : vector<64x9xf32>
    %13 = tpu.matmul %11, %12, %cst_10 {dimension_numbers = #tpu.dot_dimension_numbers<[1], [0], [0], [1], [0, 0, 1, 1], [], []>} : vector<64x128xbf16>, vector<128x9xbf16>, vector<64x9xf32> -> vector<64x9xf32>
    %c0_11 = arith.constant 0 : index
    %c0_12 = arith.constant 0 : index
    %14 = vector.load %arg5[%c0_11, %c0_12] : memref<64x9xf32, #tpu.memory_space<vmem>>, vector<64x9xf32>
    tpu.vector_store %arg5[%c0_11, %c0_12], %13 {strides = array<i32>} : memref<64x9xf32, #tpu.memory_space<vmem>>, vector<64x9xf32>,
    return
  }
  func.func @transform_0(%arg0: i32) -> (i32, i32) {
    %c0_i32 = arith.constant 0 : i32
    %c0_i32_0 = arith.constant 0 : i32
    return %arg0, %c0_i32 : i32, i32
  }
  func.func @transform_1(%arg0: i32) -> (i32, i32) {
    %c0_i32 = arith.constant 0 : i32
    %c0_i32_0 = arith.constant 0 : i32
    %c0_i32_1 = arith.constant 0 : i32
    return %c0_i32, %c0_i32_0 : i32, i32
  }
  func.func @transform_2(%arg0: i32) -> (i32, i32) {
    %c0_i32 = arith.constant 0 : i32
    %c0_i32_0 = arith.constant 0 : i32
    %c0_i32_1 = arith.constant 0 : i32
    return %c0_i32, %c0_i32_0 : i32, i32
  }
  func.func @transform_3(%arg0: i32) -> (i32, i32) {
    %c0_i32 = arith.constant 0 : i32
    %c0_i32_0 = arith.constant 0 : i32
    %c0_i32_1 = arith.constant 0 : i32
    return %c0_i32, %c0_i32_0 : i32, i32
  }
  func.func @transform_4(%arg0: i32) -> (i32, i32) {
    %c0_i32 = arith.constant 0 : i32
    %c0_i32_0 = arith.constant 0 : i32
    return %arg0, %c0_i32 : i32, i32
  }
}

</mosaic_0001>

<llo_original>
// kernel: tpu_custom_call.1
$region0: #{tpu_custom_call.1}
  #allocation0 [shape = 'u32[]', space=smem, size = 0x4, offset = 0x4, fixed_abs, tag = 'smem constant byte address 0x4 - core index']
  #allocation1 [shape = 'u32[144,128]{1,0:T(1,128)}', space=vmem, size = 0x12000, scoped, tag = 'internal scratch']
  %s0 = inlined_call_operand.vmem [shape: f32[64,9], index: 0, kind: input, shape index: {}]
  %s1 = inlined_call_operand.vmem [shape: bf16[9,128], index: 1, kind: input, shape index: {}]
  %s2 = inlined_call_operand.vmem [shape: bf16[128,128], index: 2, kind: input, shape index: {}]
  %s3 = inlined_call_operand.vmem [shape: bf16[128,9], index: 3, kind: input, shape index: {}]
  %s4 = inlined_call_operand.vmem [shape: f32[64,9], index: 4, kind: output, shape index: {}]
  %s5 = sld [smem:[#allocation0]]
  $region26: #{tpu_custom_call.1} parent=0
    _
  %s7 = ssub.s32 1, %s5
  %s8 = scalar_select 0, %s7, %s5
  // Predicated region
  $region2: #{tpu_custom_call.1} parent=0 // pred_check
    _
  $region3: #{tpu_custom_call.1} parent=0 // pred_check_branch
    %10 = sbr.rel (0) target = $region5
  $region4: #{tpu_custom_call.1} parent=0 // pred_region
    _
  $region5: #{tpu_custom_call.1} parent=0 // pred_fallthru
    _
  // Predicated region
  $region6: #{tpu_custom_call.1} parent=0 // pred_check
    _
  $region7: #{tpu_custom_call.1} parent=0 // pred_check_branch
    %12 = sbr.rel (0) target = $region9
  $region8: #{tpu_custom_call.1} parent=0 // pred_region
    _
  $region9: #{tpu_custom_call.1} parent=0 // pred_fallthru
    _
  // Predicated region
  $region10: #{tpu_custom_call.1} parent=0 // pred_check
    _
  $region11: #{tpu_custom_call.1} parent=0 // pred_check_branch
    %14 = sbr.rel (0) target = $region13
  $region12: #{tpu_custom_call.1} parent=0 // pred_region
    _
  $region13: #{tpu_custom_call.1} parent=0 // pred_fallthru
    _
  // Predicated region
  $region14: #{tpu_custom_call.1} parent=0 // pred_check
    _
  $region15: #{tpu_custom_call.1} parent=0 // pred_check_branch
    %16 = sbr.rel (0) target = $region17
  $region16: #{tpu_custom_call.1} parent=0 // pred_region
    _
  $region17: #{tpu_custom_call.1} parent=0 // pred_fallthru
    _
  %v18 = vld [vmem:[%s0] sm:$0xff]
  %v19 = vld [vmem:[%s0 + $0x8] sm:$0xff]
  %v20 = vld [vmem:[%s0 + $0x10] sm:$0xff]
  %v21 = vld [vmem:[%s0 + $0x18] sm:$0xff]
  %v22 = vld [vmem:[%s0 + $0x20] sm:$0xff]
  %v23 = vld [vmem:[%s0 + $0x28] sm:$0xff]
  %v24 = vld [vmem:[%s0 + $0x30] sm:$0xff]
  %v25 = vld [vmem:[%s0 + $0x38] sm:$0xff]
  %v26 = vpack.c.bf16 %v19, %v18
  %v27 = vpack.c.bf16 %v21, %v20
  %v28 = vpack.c.bf16 %v23, %v22
  %v29 = vpack.c.bf16 %v25, %v24
  %v30 = vld [vmem:[%s1] sm:$0xf]
  %v31 = vld [vmem:[%s1 + $0x4] sm:$0x1]
  %v34 = vunpack.c.l.b16 %v30
  %v35 = vunpack.c.l.b16 %v31
  %v36 = vpack.c.b16 %v35, %v34
  %vm37 = vcmask 72704
  %v39 = vsel %vm37, %v26, 0
  %v42 = vsel %vm37, %v27, 0
  %v45 = vsel %vm37, %v28, 0
  %v48 = vsel %vm37, %v29, 0
  %vm50 = vcmask 1043456
  %vm51 = vcmask 1044480
  %v52 = vsel %vm50, 4294967295, 65535
  %v53 = vsel %vm51, %v52, 0
  %v55 = vand.u32 %v36, %v53
  %57 = vmatprep.subr.bf16.mxu0 0
  %58 = vmatpush1.bf16.msra.mxu0 %v55
  %59 = vmatprep.subr.bf16.mxu0 0
  %60 = vmatpush1.bf16.msra.mxu0 0
  %61 = vmatprep.subr.bf16.mxu0 0
  %62 = vmatpush1.bf16.msra.mxu0 0
  %63 = vmatprep.subr.bf16.mxu0 0
  %64 = vmatpush1.bf16.msra.mxu0 0
  %65 = vmatprep.subr.bf16.mxu0 0
  %66 = vmatpush1.bf16.msra.mxu0 0
  %67 = vmatprep.subr.bf16.mxu0 0
  %68 = vmatpush1.bf16.msra.mxu0 0
  %69 = vmatprep.subr.bf16.mxu0 0
  %70 = vmatpush1.bf16.msra.mxu0 0
  %71 = vmatprep.subr.bf16.mxu0 0
  %72 = vmatpush1.bf16.msra.mxu0 0
  %73 = vmatprep.subr.bf16.mxu0 0
  %74 = vmatpush1.bf16.msra.mxu0 0
  %75 = vmatprep.subr.bf16.mxu0 0
  %76 = vmatpush1.bf16.msra.mxu0 0
  %77 = vmatprep.subr.bf16.mxu0 0
  %78 = vmatpush1.bf16.msra.mxu0 0
  %79 = vmatprep.subr.bf16.mxu0 0
  %80 = vmatpush1.bf16.msra.mxu0 0
  %81 = vmatprep.subr.bf16.mxu0 0
  %82 = vmatpush1.bf16.msra.mxu0 0
  %83 = vmatprep.subr.bf16.mxu0 0
  %84 = vmatpush1.bf16.msra.mxu0 0
  %85 = vmatprep.subr.bf16.mxu0 0
  %86 = vmatpush1.bf16.msra.mxu0 0
  %87 = vmatprep.subr.bf16.mxu0 0
  %88 = vmatpush1.bf16.msra.mxu0 0
  %89 = vmatprep.mubr.bf16.mxu0 0
  %90 = vmatmul.mubr.bf16.gmra.mrb[0].mxu0 %v39
  %v91 = vpop.f32.mrb[0].mxu0
  %v92 = vadd.f32 0.0, %v91
  %v93 = vpop.f32.mrb[0].mxu0
  %v94 = vpop.f32.mrb[0].mxu0
  %v95 = vadd.f32 0.0, %v94
  %v96 = vpop.f32.mrb[0].mxu0
  %97 = vmatprep.mubr.bf16.mxu0 0
  %98 = vmatmul.mubr.bf16.gmra.mrb[0].mxu0 %v42
  %v99 = vpop.f32.mrb[0].mxu0
  %v100 = vadd.f32 0.0, %v99
  %v101 = vpop.f32.mrb[0].mxu0
  %v102 = vpop.f32.mrb[0].mxu0
  %v103 = vadd.f32 0.0, %v102
  %v104 = vpop.f32.mrb[0].mxu0
  %105 = vmatprep.mubr.bf16.mxu0 0
  %106 = vmatmul.mubr.bf16.gmra.mrb[0].mxu0 %v45
  %v107 = vpop.f32.mrb[0].mxu0
  %v108 = vadd.f32 0.0, %v107
  %v109 = vpop.f32.mrb[0].mxu0
  %v110 = vpop.f32.mrb[0].mxu0
  %v111 = vadd.f32 0.0, %v110
  %v112 = vpop.f32.mrb[0].mxu0
  %113 = vmatprep.mubr.bf16.mxu0 0
  %114 = vmatmul.mubr.bf16.gmra.mrb[0].mxu0 %v48
  %v115 = vpop.f32.mrb[0].mxu0
  %v116 = vadd.f32 0.0, %v115
  %v117 = vpop.f32.mrb[0].mxu0
  %v118 = vpop.f32.mrb[0].mxu0
  %v119 = vadd.f32 0.0, %v118
  %v120 = vpop.f32.mrb[0].mxu0
  %121 = vdwg.mxu0
  %v122 = vmax.f32 %v92, 0.0
  %v123 = vmax.f32 %v95, 0.0
  %v124 = vmax.f32 %v100, 0.0
  %v125 = vmax.f32 %v103, 0.0
  %v126 = vmax.f32 %v108, 0.0
  %v127 = vmax.f32 %v111, 0.0
  %v128 = vmax.f32 %v116, 0.0
  %v129 = vmax.f32 %v119, 0.0
  %v130 = vpack.c.bf16 %v123, %v122
  %v131 = vpack.c.bf16 %v125, %v124
  %v132 = vpack.c.bf16 %v127, %v126
  %v133 = vpack.c.bf16 %v129, %v128
  %v134 = vld [vmem:[%s2] sm:$0xf]
  %v135 = vld [vmem:[%s2 + $0x4] sm:$0xf]
  %v136 = vld [vmem:[%s2 + $0x8] sm:$0xf]
  %v137 = vld [vmem:[%s2 + $0xc] sm:$0xf]
  %v138 = vld [vmem:[%s2 + $0x10] sm:$0xf]
  %v139 = vld [vmem:[%s2 + $0x14] sm:$0xf]
  %v140 = vld [vmem:[%s2 + $0x18] sm:$0xf]
  %v141 = vld [vmem:[%s2 + $0x1c] sm:$0xf]
  %v142 = vld [vmem:[%s2 + $0x20] sm:$0xf]
  %v143 = vld [vmem:[%s2 + $0x24] sm:$0xf]
  %v144 = vld [vmem:[%s2 + $0x28] sm:$0xf]
  %v145 = vld [vmem:[%s2 + $0x2c] sm:$0xf]
  %v146 = vld [vmem:[%s2 + $0x30] sm:$0xf]
  %v147 = vld [vmem:[%s2 + $0x34] sm:$0xf]
  %v148 = vld [vmem:[%s2 + $0x38] sm:$0xf]
  %v149 = vld [vmem:[%s2 + $0x3c] sm:$0xf]
  %v166 = vunpack.c.l.b16 %v134
  %v167 = vunpack.c.l.b16 %v135
  %v168 = vunpack.c.l.b16 %v136
  %v169 = vunpack.c.l.b16 %v137
  %v170 = vunpack.c.l.b16 %v138
  %v171 = vunpack.c.l.b16 %v139
  %v172 = vunpack.c.l.b16 %v140
  %v173 = vunpack.c.l.b16 %v141
  %v174 = vunpack.c.l.b16 %v142
  %v175 = vunpack.c.l.b16 %v143
  %v176 = vunpack.c.l.b16 %v144
  %v177 = vunpack.c.l.b16 %v145
  %v178 = vunpack.c.l.b16 %v146
  %v179 = vunpack.c.l.b16 %v147
  %v180 = vunpack.c.l.b16 %v148
  %v181 = vunpack.c.l.b16 %v149
  %v182 = vpack.c.b16 %v167, %v166
  %v183 = vpack.c.b16 %v169, %v168
  %v184 = vpack.c.b16 %v171, %v170
  %v185 = vpack.c.b16 %v173, %v172
  %v186 = vpack.c.b16 %v175, %v174
  %v187 = vpack.c.b16 %v177, %v176
  %v188 = vpack.c.b16 %v179, %v178
  %v189 = vpack.c.b16 %v181, %v180
  %198 = vmatprep.subr.bf16.mxu0 0
  %199 = vmatpush1.bf16.msra.mxu0 %v182
  %200 = vmatprep.subr.bf16.mxu0 0
  %201 = vmatpush1.bf16.msra.mxu0 %v183
  %202 = vmatprep.subr.bf16.mxu0 0
  %203 = vmatpush1.bf16.msra.mxu0 %v184
  %204 = vmatprep.subr.bf16.mxu0 0
  %205 = vmatpush1.bf16.msra.mxu0 %v185
  %206 = vmatprep.subr.bf16.mxu0 0
  %207 = vmatpush1.bf16.msra.mxu0 %v186
  %208 = vmatprep.subr.bf16.mxu0 0
  %209 = vmatpush1.bf16.msra.mxu0 %v187
  %210 = vmatprep.subr.bf16.mxu0 0
  %211 = vmatpush1.bf16.msra.mxu0 %v188
  %212 = vmatprep.subr.bf16.mxu0 0
  %213 = vmatpush1.bf16.msra.mxu0 %v189
  %214 = vmatprep.subr.bf16.mxu0 0
  %215 = vmatpush1.bf16.msra.mxu0 0
  %216 = vmatprep.subr.bf16.mxu0 0
  %217 = vmatpush1.bf16.msra.mxu0 0
  %218 = vmatprep.subr.bf16.mxu0 0
  %219 = vmatpush1.bf16.msra.mxu0 0
  %220 = vmatprep.subr.bf16.mxu0 0
  %221 = vmatpush1.bf16.msra.mxu0 0
  %222 = vmatprep.subr.bf16.mxu0 0
  %223 = vmatpush1.bf16.msra.mxu0 0
  %224 = vmatprep.subr.bf16.mxu0 0
  %225 = vmatpush1.bf16.msra.mxu0 0
  %226 = vmatprep.subr.bf16.mxu0 0
  %227 = vmatpush1.bf16.msra.mxu0 0
  %228 = vmatprep.subr.bf16.mxu0 0
  %229 = vmatpush1.bf16.msra.mxu0 0
  %230 = vmatprep.mubr.bf16.mxu0 0
  %231 = vmatmul.mubr.bf16.gmra.mrb[0].mxu0 %v130
  %v232 = vpop.f32.mrb[0].mxu0
  %v233 = vadd.f32 0.0, %v232
  %v234 = vpop.f32.mrb[0].mxu0
  %v235 = vpop.f32.mrb[0].mxu0
  %v236 = vadd.f32 0.0, %v235
  %v237 = vpop.f32.mrb[0].mxu0
  %238 = vmatprep.mubr.bf16.mxu0 0
  %239 = vmatmul.mubr.bf16.gmra.mrb[0].mxu0 %v131
  %v240 = vpop.f32.mrb[0].mxu0
  %v241 = vadd.f32 0.0, %v240
  %v242 = vpop.f32.mrb[0].mxu0
  %v243 = vpop.f32.mrb[0].mxu0
  %v244 = vadd.f32 0.0, %v243
  %v245 = vpop.f32.mrb[0].mxu0
  %246 = vmatprep.mubr.bf16.mxu0 0
  %247 = vmatmul.mubr.bf16.gmra.mrb[0].mxu0 %v132
  %v248 = vpop.f32.mrb[0].mxu0
  %v249 = vadd.f32 0.0, %v248
  %v250 = vpop.f32.mrb[0].mxu0
  %v251 = vpop.f32.mrb[0].mxu0
  %v252 = vadd.f32 0.0, %v251
  %v253 = vpop.f32.mrb[0].mxu0
  %254 = vmatprep.mubr.bf16.mxu0 0
  %255 = vmatmul.mubr.bf16.gmra.mrb[0].mxu0 %v133
  %v256 = vpop.f32.mrb[0].mxu0
  %v257 = vadd.f32 0.0, %v256
  %v258 = vpop.f32.mrb[0].mxu0
  %v259 = vpop.f32.mrb[0].mxu0
  %v260 = vadd.f32 0.0, %v259
  %v261 = vpop.f32.mrb[0].mxu0
  %262 = vdwg.mxu0
  %v263 = vmax.f32 %v233, 0.0
  %v264 = vmax.f32 %v236, 0.0
  %v265 = vmax.f32 %v241, 0.0
  %v266 = vmax.f32 %v244, 0.0
  %v267 = vmax.f32 %v249, 0.0
  %v268 = vmax.f32 %v252, 0.0
  %v269 = vmax.f32 %v257, 0.0
  %v270 = vmax.f32 %v260, 0.0
  %v271 = vpack.c.bf16 %v264, %v263
  %v272 = vpack.c.bf16 %v266, %v265
  %v273 = vpack.c.bf16 %v268, %v267
  %v274 = vpack.c.bf16 %v270, %v269
  %v275 = vld [vmem:[%s3] sm:$0xf]
  %v276 = vld [vmem:[%s3 + $0x4] sm:$0xf]
  %v277 = vld [vmem:[%s3 + $0x8] sm:$0xf]
  %v278 = vld [vmem:[%s3 + $0xc] sm:$0xf]
  %v279 = vld [vmem:[%s3 + $0x10] sm:$0xf]
  %v280 = vld [vmem:[%s3 + $0x14] sm:$0xf]
  %v281 = vld [vmem:[%s3 + $0x18] sm:$0xf]
  %v282 = vld [vmem:[%s3 + $0x1c] sm:$0xf]
  %v283 = vld [vmem:[%s3 + $0x20] sm:$0xf]
  %v284 = vld [vmem:[%s3 + $0x24] sm:$0xf]
  %v285 = vld [vmem:[%s3 + $0x28] sm:$0xf]
  %v286 = vld [vmem:[%s3 + $0x2c] sm:$0xf]
  %v287 = vld [vmem:[%s3 + $0x30] sm:$0xf]
  %v288 = vld [vmem:[%s3 + $0x34] sm:$0xf]
  %v289 = vld [vmem:[%s3 + $0x38] sm:$0xf]
  %v290 = vld [vmem:[%s3 + $0x3c] sm:$0xf]
  %v307 = vunpack.c.l.b16 %v275
  %v308 = vunpack.c.l.b16 %v276
  %v309 = vunpack.c.l.b16 %v277
  %v310 = vunpack.c.l.b16 %v278
  %v311 = vunpack.c.l.b16 %v279
  %v312 = vunpack.c.l.b16 %v280
  %v313 = vunpack.c.l.b16 %v281
  %v314 = vunpack.c.l.b16 %v282
  %v315 = vunpack.c.l.b16 %v283
  %v316 = vunpack.c.l.b16 %v284
  %v317 = vunpack.c.l.b16 %v285
  %v318 = vunpack.c.l.b16 %v286
  %v319 = vunpack.c.l.b16 %v287
  %v320 = vunpack.c.l.b16 %v288
  %v321 = vunpack.c.l.b16 %v289
  %v322 = vunpack.c.l.b16 %v290
  %v323 = vpack.c.b16 %v308, %v307
  %v324 = vpack.c.b16 %v310, %v309
  %v325 = vpack.c.b16 %v312, %v311
  %v326 = vpack.c.b16 %v314, %v313
  %v327 = vpack.c.b16 %v316, %v315
  %v328 = vpack.c.b16 %v318, %v317
  %v329 = vpack.c.b16 %v320, %v319
  %v330 = vpack.c.b16 %v322, %v321
  %339 = vmatprep.subr.bf16.mxu0 0
  %340 = vmatpush1.bf16.msra.mxu0 %v323
  %341 = vmatprep.subr.bf16.mxu0 0
  %342 = vmatpush1.bf16.msra.mxu0 %v324
  %343 = vmatprep.subr.bf16.mxu0 0
  %344 = vmatpush1.bf16.msra.mxu0 %v325
  %345 = vmatprep.subr.bf16.mxu0 0
  %346 = vmatpush1.bf16.msra.mxu0 %v326
  %347 = vmatprep.subr.bf16.mxu0 0
  %348 = vmatpush1.bf16.msra.mxu0 %v327
  %349 = vmatprep.subr.bf16.mxu0 0
  %350 = vmatpush1.bf16.msra.mxu0 %v328
  %351 = vmatprep.subr.bf16.mxu0 0
  %352 = vmatpush1.bf16.msra.mxu0 %v329
  %353 = vmatprep.subr.bf16.mxu0 0
  %354 = vmatpush1.bf16.msra.mxu0 %v330
  %355 = vmatprep.subr.bf16.mxu0 0
  %356 = vmatpush1.bf16.msra.mxu0 0
  %357 = vmatprep.subr.bf16.mxu0 0
  %358 = vmatpush1.bf16.msra.mxu0 0
  %359 = vmatprep.subr.bf16.mxu0 0
  %360 = vmatpush1.bf16.msra.mxu0 0
  %361 = vmatprep.subr.bf16.mxu0 0
  %362 = vmatpush1.bf16.msra.mxu0 0
  %363 = vmatprep.subr.bf16.mxu0 0
  %364 = vmatpush1.bf16.msra.mxu0 0
  %365 = vmatprep.subr.bf16.mxu0 0
  %366 = vmatpush1.bf16.msra.mxu0 0
  %367 = vmatprep.subr.bf16.mxu0 0
  %368 = vmatpush1.bf16.msra.mxu0 0
  %369 = vmatprep.subr.bf16.mxu0 0
  %370 = vmatpush1.bf16.msra.mxu0 0
  %371 = vmatprep.mubr.bf16.mxu0 0
  %372 = vmatmul.mubr.bf16.gmra.mrb[0].mxu0 %v271
  %v373 = vpop.f32.mrb[0].mxu0
  %v374 = vadd.f32 0.0, %v373
  %v375 = vpop.f32.mrb[0].mxu0
  %v376 = vpop.f32.mrb[0].mxu0
  %v377 = vadd.f32 0.0, %v376
  %v378 = vpop.f32.mrb[0].mxu0
  %379 = vmatprep.mubr.bf16.mxu0 0
  %380 = vmatmul.mubr.bf16.gmra.mrb[0].mxu0 %v272
  %v381 = vpop.f32.mrb[0].mxu0
  %v382 = vadd.f32 0.0, %v381
  %v383 = vpop.f32.mrb[0].mxu0
  %v384 = vpop.f32.mrb[0].mxu0
  %v385 = vadd.f32 0.0, %v384
  %v386 = vpop.f32.mrb[0].mxu0
  %387 = vmatprep.mubr.bf16.mxu0 0
  %388 = vmatmul.mubr.bf16.gmra.mrb[0].mxu0 %v273
  %v389 = vpop.f32.mrb[0].mxu0
  %v390 = vadd.f32 0.0, %v389
  %v391 = vpop.f32.mrb[0].mxu0
  %v392 = vpop.f32.mrb[0].mxu0
  %v393 = vadd.f32 0.0, %v392
  %v394 = vpop.f32.mrb[0].mxu0
  %395 = vmatprep.mubr.bf16.mxu0 0
  %396 = vmatmul.mubr.bf16.gmra.mrb[0].mxu0 %v274
  %v397 = vpop.f32.mrb[0].mxu0
  %v398 = vadd.f32 0.0, %v397
  %v399 = vpop.f32.mrb[0].mxu0
  %v400 = vpop.f32.mrb[0].mxu0
  %v401 = vadd.f32 0.0, %v400
  %v402 = vpop.f32.mrb[0].mxu0
  %403 = vdwg.mxu0
  %404 = vst.msk [vmem:[%s4] sm:$0xff] %vm37, %v374
  %405 = vst.msk [vmem:[%s4 + $0x8] sm:$0xff] %vm37, %v377
  %406 = vst.msk [vmem:[%s4 + $0x10] sm:$0xff] %vm37, %v382
  %407 = vst.msk [vmem:[%s4 + $0x18] sm:$0xff] %vm37, %v385
  %408 = vst.msk [vmem:[%s4 + $0x20] sm:$0xff] %vm37, %v390
  %409 = vst.msk [vmem:[%s4 + $0x28] sm:$0xff] %vm37, %v393
  %410 = vst.msk [vmem:[%s4 + $0x30] sm:$0xff] %vm37, %v398
  %411 = vst.msk [vmem:[%s4 + $0x38] sm:$0xff] %vm37, %v401
  // Predicated region
  $region18: #{tpu_custom_call.1} parent=0 // pred_check
    _
  $region19: #{tpu_custom_call.1} parent=0 // pred_check_branch
    %413 = sbr.rel (0) target = $region21
  $region20: #{tpu_custom_call.1} parent=0 // pred_region
    _
  $region21: #{tpu_custom_call.1} parent=0 // pred_fallthru
    _
  // Predicated region
  $region22: #{tpu_custom_call.1} parent=0 // pred_check
    _
  $region23: #{tpu_custom_call.1} parent=0 // pred_check_branch
    %415 = sbr.rel (0) target = $region25
  $region24: #{tpu_custom_call.1} parent=0 // pred_region
    _
  $region25: #{tpu_custom_call.1} parent=0 // pred_fallthru
    _

</llo_original>
